<compile_context>
chip_gen: v5e
topology: v5e:2x2
jax: 0.10.0
libtpu: 0.0.40
codegen_flags: <defaults>
</compile_context>

<pallas_src>
import functools

import jax
import jax.numpy as jnp
from jax.experimental import pallas as pl
from jax.experimental.pallas import tpu as pltpu

C_PAD = 128   # lane-padded stem feature width (true Cfeat <= 128)
D_PAD = 128   # lane-padded head output width  (true out_dim <= 128)
K_PAD = 32    # padded im2col contraction dim  (9*Cin = 27 -> 32)


# ----------------------------------------------------------------------------
# Fused kernel: stem conv (im2col matmul) + swish + GAP + Linear head.
# Grid = (batch, row_tiles); GAP accumulates across row_tiles in VMEM scratch.
# ----------------------------------------------------------------------------
def _fused_head_kernel(patch_ref, w_ref, wfc_ref, bfc_ref, o_ref, acc_ref, *,
                       tm, inv_hw):
    # patch_ref: [1, TM, K_PAD]  bf16 im2col rows for this (image, row-tile)
    # w_ref    : [K_PAD, C_PAD]  bf16 stem weight (zero-padded)
    # wfc_ref  : [C_PAD, D_PAD]  bf16 myfc weight (zero-padded, resident)
    # bfc_ref  : [1, D_PAD]      f32 myfc bias (zero-padded)
    # o_ref    : [1, 1, D_PAD]   f32 head output for this image
    # acc_ref  : [8, C_PAD]      f32 GAP partial-sum accumulator (scratch)
    t = pl.program_id(1)

    @pl.when(t == 0)
    def _():
        acc_ref[...] = jnp.zeros_like(acc_ref)

    # Stem conv as im2col matmul: bf16 operands, f32 accumulation on the MXU.
    y = jnp.dot(patch_ref[0], w_ref[...],
                preferred_element_type=jnp.float32)          # [TM, C_PAD] f32
    y = y * jax.nn.sigmoid(y)                                # swish / SiLU (f32)

    # GAP partial sum via MXU ones-row matmul (keeps the reduce off VPU/XLU;
    # padded rows/channels are exactly zero so they contribute nothing).
    ones = jnp.ones((8, tm), jnp.float32)
    acc_ref[...] += jnp.dot(ones, y, preferred_element_type=jnp.float32)

    @pl.when(t == pl.num_programs(1) - 1)
    def _():
        # GAP == sum * 1/(H*W); nn.Dropout(0.5) is identity at eval time.
        pooled = acc_ref[0:1, :] * inv_hw                    # [1, C_PAD] f32
        out = jnp.dot(pooled, wfc_ref[...].astype(jnp.float32),
                      preferred_element_type=jnp.float32) + bfc_ref[...]
        o_ref[...] = out.reshape(1, 1, D_PAD)


def effnet_meta_forward(x_nchw, w_stem, w_fc, b_fc):
    """Full EffnetMeta (stand-in backbone) forward: NCHW image -> [N, out_dim]."""
    N, Cin, H, W = x_nchw.shape
    kh, kw, _, Cfeat = w_stem.shape
    D = w_fc.shape[1]
    assert kh == 3 and kw == 3
    assert Cfeat <= C_PAD and D <= D_PAD and kh * kw * Cin <= K_PAD

    HW = H * W
    # Row-tile size from a VMEM budget: double-buffered [TM, K_PAD] bf16 input
    # block (lane-padded to 128) + [TM, C_PAD] f32 intermediate ~= 0.5 MiB at
    # TM=512 -> far under every chip's scoped-VMEM limit, and TM >= 256-512
    # fills the 256-wide v6e/v7x MXU M dimension.
    TM = 512 if HW >= 512 else ((HW + 7) // 8) * 8
    HWp = ((HW + TM - 1) // TM) * TM
    n_tiles = HWp // TM

    # ---- host-side prep (plain XLA ops, lane-dense contiguous outputs) ------
    # NCHW -> NHWC, SAME halo pad, 9-tap im2col -> [N, HWp, K_PAD] bf16.
    x_nhwc = jnp.transpose(x_nchw, (0, 2, 3, 1)).astype(jnp.float32)
    xp = jnp.pad(x_nhwc, ((0, 0), (1, 1), (1, 1), (0, 0)))
    taps = [xp[:, dy:dy + H, dx:dx + W, :] for dy in range(3) for dx in range(3)]
    patch = jnp.concatenate(taps, axis=-1).reshape(N, HW, kh * kw * Cin)
    patch = jnp.pad(patch, ((0, 0), (0, HWp - HW), (0, K_PAD - kh * kw * Cin)))
    patch = patch.astype(jnp.bfloat16)

    # Stem weight -> [K_PAD, C_PAD] bf16 (zero-padded, lane-dense output).
    wmat = w_stem.reshape(kh * kw * Cin, Cfeat).astype(jnp.float32)
    wmat = jnp.pad(wmat, ((0, K_PAD - kh * kw * Cin),
                          (0, C_PAD - Cfeat))).astype(jnp.bfloat16)
    # Head weight bf16 (halves resident VMEM); bias stays f32.
    wfc = jnp.pad(w_fc.astype(jnp.float32),
                  ((0, C_PAD - Cfeat), (0, D_PAD - D))).astype(jnp.bfloat16)
    bfc = jnp.pad(b_fc.reshape(1, D).astype(jnp.float32), ((0, 0), (0, D_PAD - D)))

    kernel = functools.partial(_fused_head_kernel, tm=TM, inv_hw=1.0 / float(HW))

    out = pl.pallas_call(
        kernel,
        out_shape=jax.ShapeDtypeStruct((N, 1, D_PAD), jnp.float32),
        grid_spec=pltpu.PrefetchScalarGridSpec(
            num_scalar_prefetch=0,
            grid=(N, n_tiles),                               # batch x row tiles
            in_specs=[
                pl.BlockSpec((1, TM, K_PAD), lambda n, t: (n, t, 0)),
                pl.BlockSpec((K_PAD, C_PAD), lambda n, t: (0, 0)),
                pl.BlockSpec((C_PAD, D_PAD), lambda n, t: (0, 0)),
                pl.BlockSpec((1, D_PAD), lambda n, t: (0, 0)),
            ],
            out_specs=pl.BlockSpec((1, 1, D_PAD), lambda n, t: (n, 0, 0)),
            scratch_shapes=[pltpu.VMEM((8, C_PAD), jnp.float32)],
        ),
        compiler_params=pltpu.CompilerParams(
            dimension_semantics=("parallel", "arbitrary"),   # batch parallel, reduce arbitrary
            vmem_limit_bytes=32 * 1024 * 1024,               # explicit budget (v7x-safe)
        ),
    )(patch, wmat, wfc, bfc)
    return out[:, 0, :D]                                     # drop lane padding


# ----------------------------------------------------------------------------
# Module wrapper (deterministic synthetic parameters)
# ----------------------------------------------------------------------------
class EffnetMetaPallas:
    def __init__(self, out_dim, in_channels=3, feat_channels=32, seed=0):
        key = jax.random.PRNGKey(seed)
        k_stem, k_w, k_b = jax.random.split(key, 3)
        # stem conv weight [kh, kw, Cin, Cfeat] (BN folded / identity at init)
        self.w_stem = jax.random.normal(
            k_stem, (3, 3, in_channels, feat_channels), jnp.float32) * 0.1
        # classifier-replacement Linear: myfc [Cfeat, out_dim] + bias [out_dim]
        self.w_fc = jax.random.normal(
            k_w, (feat_channels, out_dim), jnp.float32) * 0.1
        self.b_fc = jax.random.normal(k_b, (out_dim,), jnp.float32) * 0.01
        self._fwd = jax.jit(effnet_meta_forward)

    def __call__(self, x_nchw, x_meta=None):
        # x_meta accepted but unused — the reference forward() never uses it.
        return self._fwd(x_nchw, self.w_stem, self.w_fc, self.b_fc)


if __name__ == "__main__":
    key = jax.random.PRNGKey(0)
    # small shapes: batch=2, RGB channels=3, spatial=16x16, feat=32, out_dim=8
    x = jax.random.normal(key, (2, 3, 16, 16), jnp.float32)

    model = EffnetMetaPallas(out_dim=8, in_channels=3, feat_channels=32, seed=0)
    y = model(x)
    jax.block_until_ready(y)
    assert y.shape == (2, 8) and y.dtype == jnp.float32

    # pure-JAX f32 reference of the same stand-in forward pass
    def ref_forward(x_nchw, w_stem, w_fc, b_fc):
        xh = jnp.transpose(x_nchw, (0, 2, 3, 1)).astype(jnp.float32)
        conv = jax.lax.conv_general_dilated(
            xh, w_stem, window_strides=(1, 1), padding="SAME",
            dimension_numbers=("NHWC", "HWIO", "NHWC"))
        feat = conv * jax.nn.sigmoid(conv)
        pooled = jnp.mean(feat, axis=(1, 2))
        return pooled @ w_fc + b_fc

    y_ref = ref_forward(x, model.w_stem, model.w_fc, model.b_fc)
    assert jnp.allclose(y, y_ref, rtol=5e-2, atol=5e-2), (y, y_ref)
    print("KERNEL_OK")
</pallas_src>

<mosaic_0001>
module attributes {stable_mosaic.version = 11 : i64} {
  func.func @_fused_head_kernel(%arg0: i32, %arg1: i32, %arg2: memref<1x256x32xbf16, #tpu.memory_space<vmem>>, %arg3: memref<32x128xbf16, #tpu.memory_space<vmem>>, %arg4: memref<128x128xbf16, #tpu.memory_space<vmem>>, %arg5: memref<1x128xf32, #tpu.memory_space<vmem>>, %arg6: memref<1x1x128xf32, #tpu.memory_space<vmem>>, %arg7: memref<8x128xf32, #tpu.memory_space<vmem>>) attributes {dimension_semantics = [#tpu.dimension_semantics<parallel>, #tpu.dimension_semantics<arbitrary>], iteration_bounds = array<i64: 2, 1>, scalar_prefetch = 0 : i64, scratch_operands = 1 : i64, tpu.core_type = #tpu.core_type<tc>, window_params = [{transform_indices = @transform_0, window_bounds = array<i64: 1, 256, 32>}, {pipeline_mode = #tpu.pipeline_mode<synchronous>, transform_indices = @transform_1, window_bounds = array<i64: 32, 128>}, {pipeline_mode = #tpu.pipeline_mode<synchronous>, transform_indices = @transform_2, window_bounds = array<i64: 128, 128>}, {pipeline_mode = #tpu.pipeline_mode<synchronous>, transform_indices = @transform_3, window_bounds = array<i64: 1, 128>}, {transform_indices = @transform_4, window_bounds = array<i64: 1, 1, 128>}]} {
    %c0_i32 = arith.constant 0 : i32
    %0 = arith.cmpi eq, %arg1, %c0_i32 : i32
    %1 = arith.extui %0 : i1 to i32
    %c0_i32_0 = arith.constant 0 : i32
    %2 = arith.cmpi ne, %1, %c0_i32_0 : i32
    scf.if %2 {
      %cst_14 = arith.constant 0.000000e+00 : f32
      %21 = vector.broadcast %cst_14 : f32 to vector<8x128xf32>
      %c0_15 = arith.constant 0 : index
      %c0_16 = arith.constant 0 : index
      %22 = vector.load %arg7[%c0_15, %c0_16] : memref<8x128xf32, #tpu.memory_space<vmem>>, vector<8x128xf32>
      tpu.vector_store %arg7[%c0_15, %c0_16], %21 {strides = array<i32>} : memref<8x128xf32, #tpu.memory_space<vmem>>, vector<8x128xf32>,
    } else {
    }
    %c0 = arith.constant 0 : index
    %c0_1 = arith.constant 0 : index
    %c0_2 = arith.constant 0 : index
    %3 = vector.load %arg2[%c0, %c0_1, %c0_2] : memref<1x256x32xbf16, #tpu.memory_space<vmem>>, vector<1x256x32xbf16>
    %4 = vector.shape_cast %3 : vector<1x256x32xbf16> to vector<256x32xbf16>
    %c0_3 = arith.constant 0 : index
    %c0_4 = arith.constant 0 : index
    %5 = vector.load %arg3[%c0_3, %c0_4] : memref<32x128xbf16, #tpu.memory_space<vmem>>, vector<32x128xbf16>
    %cst = arith.constant dense<0.000000e+00> : vector<256x128xf32>
    %6 = tpu.matmul %4, %5, %cst {dimension_numbers = #tpu.dot_dimension_numbers<[1], [0], [0], [1], [0, 0, 1, 1], [], []>} : vector<256x32xbf16>, vector<32x128xbf16>, vector<256x128xf32> -> vector<256x128xf32>
    %7 = arith.negf %6 : vector<256x128xf32>
    %8 = math.exp %7 : vector<256x128xf32>
    %cst_5 = arith.constant 1.000000e+00 : f32
    %9 = vector.broadcast %cst_5 : f32 to vector<256x128xf32>
    %10 = arith.addf %9, %8 : vector<256x128xf32>
    %11 = arith.divf %9, %10 : vector<256x128xf32>
    %12 = arith.mulf %6, %11 : vector<256x128xf32>
    %cst_6 = arith.constant 1.000000e+00 : f32
    %13 = vector.broadcast %cst_6 : f32 to vector<8x256xf32>
    %c0_7 = arith.constant 0 : index
    %c0_8 = arith.constant 0 : index
    %14 = vector.load %arg7[%c0_7, %c0_8] : memref<8x128xf32, #tpu.memory_space<vmem>>, vector<8x128xf32>
    %cst_9 = arith.constant dense<0.000000e+00> : vector<8x128xf32>
    %15 = tpu.matmul %13, %12, %cst_9 {dimension_numbers = #tpu.dot_dimension_numbers<[1], [0], [0], [1], [0, 0, 1, 1], [], []>} : vector<8x256xf32>, vector<256x128xf32>, vector<8x128xf32> -> vector<8x128xf32>
    %16 = arith.addf %14, %15 : vector<8x128xf32>
    %c0_10 = arith.constant 0 : index
    %c0_11 = arith.constant 0 : index
    %17 = vector.load %arg7[%c0_10, %c0_11] : memref<8x128xf32, #tpu.memory_space<vmem>>, vector<8x128xf32>
    tpu.vector_store %arg7[%c0_10, %c0_11], %16 {strides = array<i32>} : memref<8x128xf32, #tpu.memory_space<vmem>>, vector<8x128xf32>,
    %c0_i32_12 = arith.constant 0 : i32
    %18 = arith.cmpi eq, %arg1, %c0_i32_12 : i32
    %19 = arith.extui %18 : i1 to i32
    %c0_i32_13 = arith.constant 0 : i32
    %20 = arith.cmpi ne, %19, %c0_i32_13 : i32
    scf.if %20 {
      %c0_14 = arith.constant 0 : index
      %c0_15 = arith.constant 0 : index
      %21 = vector.load %arg7[%c0_14, %c0_15] : memref<8x128xf32, #tpu.memory_space<vmem>>, vector<1x128xf32>
      %cst_16 = arith.constant 3.906250e-03 : f32
      %22 = vector.broadcast %cst_16 : f32 to vector<1x128xf32>
      %23 = arith.mulf %21, %22 : vector<1x128xf32>
      %c0_17 = arith.constant 0 : index
      %c0_18 = arith.constant 0 : index
      %24 = vector.load %arg4[%c0_17, %c0_18] : memref<128x128xbf16, #tpu.memory_space<vmem>>, vector<128x128xbf16>
      %25 = arith.extf %24 : vector<128x128xbf16> to vector<128x128xf32>
      %cst_19 = arith.constant dense<0.000000e+00> : vector<1x128xf32>
      %26 = tpu.matmul %23, %25, %cst_19 {dimension_numbers = #tpu.dot_dimension_numbers<[1], [0], [0], [1], [0, 0, 1, 1], [], []>} : vector<1x128xf32>, vector<128x128xf32>, vector<1x128xf32> -> vector<1x128xf32>
      %c0_20 = arith.constant 0 : index
      %c0_21 = arith.constant 0 : index
      %27 = vector.load %arg5[%c0_20, %c0_21] : memref<1x128xf32, #tpu.memory_space<vmem>>, vector<1x128xf32>
      %28 = arith.addf %26, %27 : vector<1x128xf32>
      %29 = vector.shape_cast %28 : vector<1x128xf32> to vector<1x1x128xf32>
      %c0_22 = arith.constant 0 : index
      %c0_23 = arith.constant 0 : index
      %c0_24 = arith.constant 0 : index
      %30 = vector.load %arg6[%c0_22, %c0_23, %c0_24] : memref<1x1x128xf32, #tpu.memory_space<vmem>>, vector<1x1x128xf32>
      tpu.vector_store %arg6[%c0_22, %c0_23, %c0_24], %29 {strides = array<i32>} : memref<1x1x128xf32, #tpu.memory_space<vmem>>, vector<1x1x128xf32>,
    } else {
    }
    return
  }
  func.func @transform_0(%arg0: i32, %arg1: i32) -> (i32, i32, i32) {
    %c0_i32 = arith.constant 0 : i32
    %c0_i32_0 = arith.constant 0 : i32
    return %arg0, %arg1, %c0_i32 : i32, i32, i32
  }
  func.func @transform_1(%arg0: i32, %arg1: i32) -> (i32, i32) {
    %c0_i32 = arith.constant 0 : i32
    %c0_i32_0 = arith.constant 0 : i32
    %c0_i32_1 = arith.constant 0 : i32
    return %c0_i32, %c0_i32_0 : i32, i32
  }
  func.func @transform_2(%arg0: i32, %arg1: i32) -> (i32, i32) {
    %c0_i32 = arith.constant 0 : i32
    %c0_i32_0 = arith.constant 0 : i32
    %c0_i32_1 = arith.constant 0 : i32
    return %c0_i32, %c0_i32_0 : i32, i32
  }
  func.func @transform_3(%arg0: i32, %arg1: i32) -> (i32, i32) {
    %c0_i32 = arith.constant 0 : i32
    %c0_i32_0 = arith.constant 0 : i32
    %c0_i32_1 = arith.constant 0 : i32
    return %c0_i32, %c0_i32_0 : i32, i32
  }
  func.func @transform_4(%arg0: i32, %arg1: i32) -> (i32, i32, i32) {
    %c0_i32 = arith.constant 0 : i32
    %c0_i32_0 = arith.constant 0 : i32
    %c0_i32_1 = arith.constant 0 : i32
    return %arg0, %c0_i32, %c0_i32_0 : i32, i32, i32
  }
}

</mosaic_0001>

<llo_original>
// kernel: effnet_meta_forward.1
$region0: #{effnet_meta_forward.1}
  #allocation0 [shape = 'u32[]', space=smem, size = 0x4, offset = 0x4, fixed_abs, tag = 'smem constant byte address 0x4 - core index']
  #allocation1 [shape = 'u32[72,128]{1,0:T(1,128)}', space=vmem, size = 0x9000, scoped, tag = 'internal scratch']
  #allocation2 [shape = 'f32[8,128]{1,0:T(8,128)}', space=vmem, size = 0x1000, scoped, tag = 'scratch operand']
  %s0 = inlined_call_operand.vmem [shape: bf16[2,256,32], index: 0, kind: input, shape index: {}]
  %s1 = inlined_call_operand.vmem [shape: bf16[32,128], index: 1, kind: input, shape index: {}]
  %s2 = inlined_call_operand.vmem [shape: bf16[128,128], index: 2, kind: input, shape index: {}]
  %s3 = inlined_call_operand.vmem [shape: f32[1,128], index: 3, kind: input, shape index: {}]
  %s4 = inlined_call_operand.hbm [shape: f32[2,1,128], index: 4, kind: output, shape index: {}]
  %s5 = sld [smem:[#allocation0]]
  $region57: #{effnet_meta_forward.1} parent=0
    _
  %s7 = ssub.s32 1, %s5
  %s8 = scalar_select 0, %s7, %s5
  $region1: #{effnet_meta_forward.1} parent=0
    #allocation3 [shape = 'u8[1024]{0}', space=vmem, size = 0x400, scoped, tag = 'output window, operand 0']
    #allocation4 [shape = 's32[2]{0}', space=sflag, size = 0x8, scoped, tag = 'scoped memory for effnet_meta_forward.1']
    %9 = vsyncpa [#allocation4], 0
    %s10 = scalar_lea.sflag [#allocation4], 1
    %11 = vsyncpa %s10, 0
    loop: start=0, step=1, limit=4
    $region2: #{effnet_meta_forward.1} parent=1 // loop_pre_header
      _
    $region3: #{effnet_meta_forward.1} parent=1 // loop_header
      %s13 = sphi 0, %s17
      %p14 = scmp.ge.s32.totalorder %s13, 4
      %s20 = sphi 0, %s32
      %s21 = sphi 0, %s28
      %s22 = sphi 0, %s20
      %s23 = sphi 0, %s21
      %s24 = sphi 0, %s22
      %s25 = sphi 0, %s23
      %s37 = sphi 0, %s39
      %s40 = sphi 0, %s37
      %s41 = sphi 0, %s40
      %s57 = sphi 0, %s41
      %s61 = sphi 0, %s61
      %s63 = sphi 0, %s61
      %s64 = sphi 0, %s63
      %s78 = sphi 0, %s64
      %s82 = sphi 0, %s82
      %s84 = sphi 0, %s82
      %s85 = sphi 0, %s84
      %s99 = sphi 0, %s85
      %s103 = sphi 0, %s103
      %s105 = sphi 0, %s103
      %s106 = sphi 0, %s105
      %s120 = sphi 0, %s106
      %s126 = sphi 0, %s128
      %s129 = sphi 0, %s126
      %s130 = sphi 0, %s129
      %s146 = sphi 0, %s130
    $region4: #{effnet_meta_forward.1} parent=1 // loop_header_branch
      %16 = sbr.rel (%p14) target = $region8
    $region5: #{effnet_meta_forward.1} parent=1 // loop_body
      %s18 = ssub.s32 %s13, 1
      %s19 = ssub.s32 %s13, 2
      %s26 = sadd.s32 1, %s21
      %p27 = scmp.ge.s32.totalorder %s26, 1
      %s28 = scalar_select %p27, 0, %s26
      %s29 = sadd.s32 1, %s20
      %s30 = scalar_select %p27, %s29, %s20
      %p31 = scmp.ge.s32.totalorder %s30, 2
      %s32 = scalar_select %p31, 0, %s30
      %s33 = ssub.s32 %s20, %s32
      %s34 = ssub.s32 %s21, %s28
      %s35 = sor.u32 %s33, %s34
      %p36 = scmp.eq.s32.totalorder %s35, 0
      %s38 = sadd.s32 %s37, 1
      %s39 = scalar_select %p36, %s37, %s38
      %p42 = pneg %p36
      %p43 = scmp.eq.s32.totalorder %s13, 1
      %p44 = por %p42, %p43
      %p45 = scmp.ne.s32.totalorder %s37, %s40
      %p46 = scmp.eq.s32.totalorder %s13, 0
      %p47 = por %p45, %p46
      %p48 = scmp.ne.s32.totalorder %s37, %s40
      %p49 = scmp.eq.s32.totalorder %s18, 1
      %p50 = por %p48, %p49
      %p51 = scmp.ne.s32.totalorder %s40, %s41
      %p52 = scmp.eq.s32.totalorder %s18, 0
      %p53 = por %p51, %p52
      %p54 = scmp.ne.s32.totalorder %s40, %s41
      %p55 = scmp.eq.s32.totalorder %s19, 1
      %p56 = por %p54, %p55
      %p58 = scmp.ne.s32.totalorder %s41, %s57
      %p59 = scmp.eq.s32.totalorder %s19, 0
      %p60 = por %p58, %p59
      %s62 = sadd.s32 %s61, 1
      %p65 = scmp.eq.s32.totalorder %s13, 1
      %p66 = scmp.ne.s32.totalorder %s61, %s63
      %p67 = scmp.eq.s32.totalorder %s13, 0
      %p68 = por %p66, %p67
      %p69 = scmp.ne.s32.totalorder %s61, %s63
      %p70 = scmp.eq.s32.totalorder %s18, 1
      %p71 = por %p69, %p70
      %p72 = scmp.ne.s32.totalorder %s63, %s64
      %p73 = scmp.eq.s32.totalorder %s18, 0
      %p74 = por %p72, %p73
      %p75 = scmp.ne.s32.totalorder %s63, %s64
      %p76 = scmp.eq.s32.totalorder %s19, 1
      %p77 = por %p75, %p76
      %p79 = scmp.ne.s32.totalorder %s64, %s78
      %p80 = scmp.eq.s32.totalorder %s19, 0
      %p81 = por %p79, %p80
      %s83 = sadd.s32 %s82, 1
      %p86 = scmp.eq.s32.totalorder %s13, 1
      %p87 = scmp.ne.s32.totalorder %s82, %s84
      %p88 = scmp.eq.s32.totalorder %s13, 0
      %p89 = por %p87, %p88
      %p90 = scmp.ne.s32.totalorder %s82, %s84
      %p91 = scmp.eq.s32.totalorder %s18, 1
      %p92 = por %p90, %p91
      %p93 = scmp.ne.s32.totalorder %s84, %s85
      %p94 = scmp.eq.s32.totalorder %s18, 0
      %p95 = por %p93, %p94
      %p96 = scmp.ne.s32.totalorder %s84, %s85
      %p97 = scmp.eq.s32.totalorder %s19, 1
      %p98 = por %p96, %p97
      %p100 = scmp.ne.s32.totalorder %s85, %s99
      %p101 = scmp.eq.s32.totalorder %s19, 0
      %p102 = por %p100, %p101
      %s104 = sadd.s32 %s103, 1
      %p107 = scmp.eq.s32.totalorder %s13, 1
      %p108 = scmp.ne.s32.totalorder %s103, %s105
      %p109 = scmp.eq.s32.totalorder %s13, 0
      %p110 = por %p108, %p109
      %p111 = scmp.ne.s32.totalorder %s103, %s105
      %p112 = scmp.eq.s32.totalorder %s18, 1
      %p113 = por %p111, %p112
      %p114 = scmp.ne.s32.totalorder %s105, %s106
      %p115 = scmp.eq.s32.totalorder %s18, 0
      %p116 = por %p114, %p115
      %p117 = scmp.ne.s32.totalorder %s105, %s106
      %p118 = scmp.eq.s32.totalorder %s19, 1
      %p119 = por %p117, %p118
      %p121 = scmp.ne.s32.totalorder %s106, %s120
      %p122 = scmp.eq.s32.totalorder %s19, 0
      %p123 = por %p121, %p122
      %s124 = ssub.s32 %s20, %s32
      %p125 = scmp.eq.s32.totalorder %s124, 0
      %s127 = sadd.s32 %s126, 1
      %s128 = scalar_select %p125, %s126, %s127
      %p131 = pneg %p125
      %p132 = scmp.eq.s32.totalorder %s13, 1
      %p133 = por %p131, %p132
      %p134 = scmp.ne.s32.totalorder %s126, %s129
      %p135 = scmp.eq.s32.totalorder %s13, 0
      %p136 = por %p134, %p135
      %p137 = scmp.ne.s32.totalorder %s126, %s129
      %p138 = scmp.eq.s32.totalorder %s18, 1
      %p139 = por %p137, %p138
      %p140 = scmp.ne.s32.totalorder %s129, %s130
      %p141 = scmp.eq.s32.totalorder %s18, 0
      %p142 = por %p140, %p141
      %p143 = scmp.ne.s32.totalorder %s129, %s130
      %p144 = scmp.eq.s32.totalorder %s19, 1
      %p145 = por %p143, %p144
      %p147 = scmp.ne.s32.totalorder %s130, %s146
      %p148 = scmp.eq.s32.totalorder %s19, 0
      %p149 = por %p147, %p148
      %p150 = scmp.le.s32.totalorder 1, %s13
      %p151 = scmp.lt.s32.totalorder %s13, 3
      %p152 = pnand %p150, %p151
      %p153 = pneg %p152
      // Predicated region
      $region9: #{effnet_meta_forward.1} parent=5 // pred_check
        _
      $region10: #{effnet_meta_forward.1} parent=5 // pred_check_branch
        %155 = sbr.rel (%p152) target = $region12
      $region11: #{effnet_meta_forward.1} parent=5 // pred_region
        %s156 = ssub.s32 %s13, 1
        // Predicated region
        $region13: #{effnet_meta_forward.1} parent=11 // pred_check
          %p157 = pneg %p74
        $region14: #{effnet_meta_forward.1} parent=11 // pred_check_branch
          %159 = sbr.rel (%p157) target = $region16
        $region15: #{effnet_meta_forward.1} parent=11 // pred_region
          _
        $region16: #{effnet_meta_forward.1} parent=11 // pred_fallthru
          _
        // Predicated region
        $region17: #{effnet_meta_forward.1} parent=11 // pred_check
          %p160 = pneg %p95
        $region18: #{effnet_meta_forward.1} parent=11 // pred_check_branch
          %162 = sbr.rel (%p160) target = $region20
        $region19: #{effnet_meta_forward.1} parent=11 // pred_region
          _
        $region20: #{effnet_meta_forward.1} parent=11 // pred_fallthru
          _
        // Predicated region
        $region21: #{effnet_meta_forward.1} parent=11 // pred_check
          %p163 = pneg %p116
        $region22: #{effnet_meta_forward.1} parent=11 // pred_check_branch
          %165 = sbr.rel (%p163) target = $region24
        $region23: #{effnet_meta_forward.1} parent=11 // pred_region
          _
        $region24: #{effnet_meta_forward.1} parent=11 // pred_fallthru
          _
      $region12: #{effnet_meta_forward.1} parent=5 // pred_fallthru
        _
      %p166 = scmp.lt.s32.totalorder %s13, 2
      // Predicated region
      $region25: #{effnet_meta_forward.1} parent=5 // pred_check
        %p167 = pneg %p166
      $region26: #{effnet_meta_forward.1} parent=5 // pred_check_branch
        %169 = sbr.rel (%p167) target = $region28
      $region27: #{effnet_meta_forward.1} parent=5 // pred_region
        // Predicated region
        $region29: #{effnet_meta_forward.1} parent=27 // pred_check
          %p170 = pneg %p47
        $region30: #{effnet_meta_forward.1} parent=27 // pred_check_branch
          %172 = sbr.rel (%p170) target = $region32
        $region31: #{effnet_meta_forward.1} parent=27 // pred_region
          %s173 = smul.u32 32, %s21
          %p174 = scmp.lt.s32.totalorder %s20, 1
          %s175 = scalar_select %p174, %s20, 1
          %p176 = scmp.lt.s32.totalorder %s173, 31
          %s177 = scalar_select %p176, %s173, 31
          %s178 = smul.addr %s175, 32
          %s179 = sadd.s32 %s177, %s178
          %s180 = smul.addr %s179, 4
          %s181 = scalar_lea.vmem %s0, %s180
          %s182 = smul.u32 32, %s21
        $region32: #{effnet_meta_forward.1} parent=27 // pred_fallthru
          _
      $region28: #{effnet_meta_forward.1} parent=5 // pred_fallthru
        _
      %p183 = scmp.le.s32.totalorder 1, %s13
      %p184 = scmp.lt.s32.totalorder %s13, 3
      %p185 = pnand %p183, %p184
      %p186 = pneg %p185
      // Predicated region
      $region33: #{effnet_meta_forward.1} parent=5 // pred_check
        _
      $region34: #{effnet_meta_forward.1} parent=5 // pred_check_branch
        %188 = sbr.rel (%p185) target = $region36
      $region35: #{effnet_meta_forward.1} parent=5 // pred_region
        %s189 = ssub.s32 %s13, 1
        %s190 = smul.u32 32, %s23
        %p191 = scmp.lt.s32.totalorder %s22, 1
        %s192 = scalar_select %p191, %s22, 1
        %p193 = scmp.lt.s32.totalorder %s190, 31
        %s194 = scalar_select %p193, %s190, 31
        %s195 = smul.addr %s192, 32
        %s196 = sadd.s32 %s194, %s195
        %s197 = smul.addr %s196, 4
        %s198 = scalar_lea.vmem %s0, %s197
        %p199 = pneg %p53
        %p200 = pneg %p50
        %p201 = pneg %p74
        %p202 = pneg %p71
        %p203 = pneg %p95
        %p204 = pneg %p92
        %p205 = pneg %p116
        %p206 = pneg %p113
        %p207 = pneg %p142
        %p208 = pneg %p139
        %s209 = sand.u32 %s129, 1
        %s210 = scalar_lea.sflag [#allocation4], %s209
        %s211 = sand.u32 %s129, 1
        %s212 = scalar_lea.vmem [#allocation3], %s211
        %s213 = smul.u32 32, %s23
        %p214 = scmp.lt.s32.totalorder %s22, 1
        %s215 = scalar_select %p214, %s22, 1
        %p216 = scmp.lt.s32.totalorder %s213, 31
        %s217 = scalar_select %p216, %s213, 31
        %s218 = smul.addr %s215, 32
        %s219 = sadd.s32 %s217, %s218
        %s220 = smul.addr %s219, 4
        %s221 = scalar_lea.vmem %s0, %s220
        %s222 = smul.u32 32, %s23
        %p224 = scmp.eq.s32.totalorder %s23, 0
        // Predicated region
        $region37: #{effnet_meta_forward.1} parent=35 // pred_check
          %p225 = pneg %p224
        $region38: #{effnet_meta_forward.1} parent=35 // pred_check_branch
          %227 = sbr.rel (%p225) target = $region40
        $region39: #{effnet_meta_forward.1} parent=35 // pred_region
          %228 = vst [vmem:[#allocation2] sm:$0xff] 0.0
        $region40: #{effnet_meta_forward.1} parent=35 // pred_fallthru
          _
        %v229 = vld [vmem:[%s221] sm:$0xf]
        %v230 = vld [vmem:[%s221 + $0x4] sm:$0xf]
        %v231 = vld [vmem:[%s221 + $0x8] sm:$0xf]
        %v232 = vld [vmem:[%s221 + $0xc] sm:$0xf]
        %v233 = vld [vmem:[%s221 + $0x10] sm:$0xf]
        %v234 = vld [vmem:[%s221 + $0x14] sm:$0xf]
        %v235 = vld [vmem:[%s221 + $0x18] sm:$0xf]
        %v236 = vld [vmem:[%s221 + $0x1c] sm:$0xf]
        %v237 = vld [vmem:[%s221 + $0x20] sm:$0xf]
        %v238 = vld [vmem:[%s221 + $0x24] sm:$0xf]
        %v239 = vld [vmem:[%s221 + $0x28] sm:$0xf]
        %v240 = vld [vmem:[%s221 + $0x2c] sm:$0xf]
        %v241 = vld [vmem:[%s221 + $0x30] sm:$0xf]
        %v242 = vld [vmem:[%s221 + $0x34] sm:$0xf]
        %v243 = vld [vmem:[%s221 + $0x38] sm:$0xf]
        %v244 = vld [vmem:[%s221 + $0x3c] sm:$0xf]
        %v245 = vld [vmem:[%s221 + $0x40] sm:$0xf]
        %v246 = vld [vmem:[%s221 + $0x44] sm:$0xf]
        %v247 = vld [vmem:[%s221 + $0x48] sm:$0xf]
        %v248 = vld [vmem:[%s221 + $0x4c] sm:$0xf]
        %v249 = vld [vmem:[%s221 + $0x50] sm:$0xf]
        %v250 = vld [vmem:[%s221 + $0x54] sm:$0xf]
        %v251 = vld [vmem:[%s221 + $0x58] sm:$0xf]
        %v252 = vld [vmem:[%s221 + $0x5c] sm:$0xf]
        %v253 = vld [vmem:[%s221 + $0x60] sm:$0xf]
        %v254 = vld [vmem:[%s221 + $0x64] sm:$0xf]
        %v255 = vld [vmem:[%s221 + $0x68] sm:$0xf]
        %v256 = vld [vmem:[%s221 + $0x6c] sm:$0xf]
        %v257 = vld [vmem:[%s221 + $0x70] sm:$0xf]
        %v258 = vld [vmem:[%s221 + $0x74] sm:$0xf]
        %v259 = vld [vmem:[%s221 + $0x78] sm:$0xf]
        %v260 = vld [vmem:[%s221 + $0x7c] sm:$0xf]
        %v261 = vld [vmem:[%s1] sm:$0xf]
        %v262 = vld [vmem:[%s1 + $0x4] sm:$0xf]
        %v263 = vld [vmem:[%s1 + $0x8] sm:$0xf]
        %v264 = vld [vmem:[%s1 + $0xc] sm:$0xf]
        %v297 = vunpack.c.l.b16 %v229
        %v298 = vunpack.c.l.b16 %v230
        %v299 = vunpack.c.l.b16 %v231
        %v300 = vunpack.c.l.b16 %v232
        %v301 = vunpack.c.l.b16 %v233
        %v302 = vunpack.c.l.b16 %v234
        %v303 = vunpack.c.l.b16 %v235
        %v304 = vunpack.c.l.b16 %v236
        %v305 = vunpack.c.l.b16 %v237
        %v306 = vunpack.c.l.b16 %v238
        %v307 = vunpack.c.l.b16 %v239
        %v308 = vunpack.c.l.b16 %v240
        %v309 = vunpack.c.l.b16 %v241
        %v310 = vunpack.c.l.b16 %v242
        %v311 = vunpack.c.l.b16 %v243
        %v312 = vunpack.c.l.b16 %v244
        %v313 = vunpack.c.l.b16 %v245
        %v314 = vunpack.c.l.b16 %v246
        %v315 = vunpack.c.l.b16 %v247
        %v316 = vunpack.c.l.b16 %v248
        %v317 = vunpack.c.l.b16 %v249
        %v318 = vunpack.c.l.b16 %v250
        %v319 = vunpack.c.l.b16 %v251
        %v320 = vunpack.c.l.b16 %v252
        %v321 = vunpack.c.l.b16 %v253
        %v322 = vunpack.c.l.b16 %v254
        %v323 = vunpack.c.l.b16 %v255
        %v324 = vunpack.c.l.b16 %v256
        %v325 = vunpack.c.l.b16 %v257
        %v326 = vunpack.c.l.b16 %v258
        %v327 = vunpack.c.l.b16 %v259
        %v328 = vunpack.c.l.b16 %v260
        %v329 = vpack.c.b16 %v298, %v297
        %v330 = vpack.c.b16 %v300, %v299
        %v331 = vpack.c.b16 %v302, %v301
        %v332 = vpack.c.b16 %v304, %v303
        %v333 = vpack.c.b16 %v306, %v305
        %v334 = vpack.c.b16 %v308, %v307
        %v335 = vpack.c.b16 %v310, %v309
        %v336 = vpack.c.b16 %v312, %v311
        %v337 = vpack.c.b16 %v314, %v313
        %v338 = vpack.c.b16 %v316, %v315
        %v339 = vpack.c.b16 %v318, %v317
        %v340 = vpack.c.b16 %v320, %v319
        %v341 = vpack.c.b16 %v322, %v321
        %v342 = vpack.c.b16 %v324, %v323
        %v343 = vpack.c.b16 %v326, %v325
        %v344 = vpack.c.b16 %v328, %v327
        %v349 = vunpack.c.l.b16 %v261
        %v350 = vunpack.c.l.b16 %v262
        %v351 = vunpack.c.l.b16 %v263
        %v352 = vunpack.c.l.b16 %v264
        %v353 = vpack.c.b16 %v350, %v349
        %v354 = vpack.c.b16 %v352, %v351
        %vm357 = vcmask 261120
        %v359 = vsel %vm357, %v329, 0
        %v362 = vsel %vm357, %v330, 0
        %v365 = vsel %vm357, %v331, 0
        %v368 = vsel %vm357, %v332, 0
        %v371 = vsel %vm357, %v333, 0
        %v374 = vsel %vm357, %v334, 0
        %v377 = vsel %vm357, %v335, 0
        %v380 = vsel %vm357, %v336, 0
        %v383 = vsel %vm357, %v337, 0
        %v386 = vsel %vm357, %v338, 0
        %v389 = vsel %vm357, %v339, 0
        %v392 = vsel %vm357, %v340, 0
        %v395 = vsel %vm357, %v341, 0
        %v398 = vsel %vm357, %v342, 0
        %v401 = vsel %vm357, %v343, 0
        %v404 = vsel %vm357, %v344, 0
        %406 = vmatpush.bf16.msra.mxu0 0
        %407 = vmatpush.bf16.msra.mxu0 0
        %408 = vmatpush.bf16.msra.mxu0 0
        %409 = vmatpush.bf16.msra.mxu0 0
        %410 = vmatpush.bf16.msra.mxu0 0
        %411 = vmatpush.bf16.msra.mxu0 0
        %412 = vmatpush.bf16.msra.mxu0 %v354
        %413 = vmatpush.bf16.msra.mxu0 %v353
        %414 = vmatmul.bf16.gmra.mxu0 %v359
        %v415 = vpop.f32.mrf.mxu0
        %v416 = vadd.f32 0.0, %v415
        %v417 = vpop.f32.mrf.mxu0
        %v418 = vadd.f32 0.0, %v417
        %419 = vmatmul.bf16.gmra.mxu0 %v362
        %v420 = vpop.f32.mrf.mxu0
        %v421 = vadd.f32 0.0, %v420
        %v422 = vpop.f32.mrf.mxu0
        %v423 = vadd.f32 0.0, %v422
        %424 = vmatmul.bf16.gmra.mxu0 %v365
        %v425 = vpop.f32.mrf.mxu0
        %v426 = vadd.f32 0.0, %v425
        %v427 = vpop.f32.mrf.mxu0
        %v428 = vadd.f32 0.0, %v427
        %429 = vmatmul.bf16.gmra.mxu0 %v368
        %v430 = vpop.f32.mrf.mxu0
        %v431 = vadd.f32 0.0, %v430
        %v432 = vpop.f32.mrf.mxu0
        %v433 = vadd.f32 0.0, %v432
        %434 = vmatmul.bf16.gmra.mxu0 %v371
        %v435 = vpop.f32.mrf.mxu0
        %v436 = vadd.f32 0.0, %v435
        %v437 = vpop.f32.mrf.mxu0
        %v438 = vadd.f32 0.0, %v437
        %439 = vmatmul.bf16.gmra.mxu0 %v374
        %v440 = vpop.f32.mrf.mxu0
        %v441 = vadd.f32 0.0, %v440
        %v442 = vpop.f32.mrf.mxu0
        %v443 = vadd.f32 0.0, %v442
        %444 = vmatmul.bf16.gmra.mxu0 %v377
        %v445 = vpop.f32.mrf.mxu0
        %v446 = vadd.f32 0.0, %v445
        %v447 = vpop.f32.mrf.mxu0
        %v448 = vadd.f32 0.0, %v447
        %449 = vmatmul.bf16.gmra.mxu0 %v380
        %v450 = vpop.f32.mrf.mxu0
        %v451 = vadd.f32 0.0, %v450
        %v452 = vpop.f32.mrf.mxu0
        %v453 = vadd.f32 0.0, %v452
        %454 = vmatmul.bf16.gmra.mxu0 %v383
        %v455 = vpop.f32.mrf.mxu0
        %v456 = vadd.f32 0.0, %v455
        %v457 = vpop.f32.mrf.mxu0
        %v458 = vadd.f32 0.0, %v457
        %459 = vmatmul.bf16.gmra.mxu0 %v386
        %v460 = vpop.f32.mrf.mxu0
        %v461 = vadd.f32 0.0, %v460
        %v462 = vpop.f32.mrf.mxu0
        %v463 = vadd.f32 0.0, %v462
        %464 = vmatmul.bf16.gmra.mxu0 %v389
        %v465 = vpop.f32.mrf.mxu0
        %v466 = vadd.f32 0.0, %v465
        %v467 = vpop.f32.mrf.mxu0
        %v468 = vadd.f32 0.0, %v467
        %469 = vmatmul.bf16.gmra.mxu0 %v392
        %v470 = vpop.f32.mrf.mxu0
        %v471 = vadd.f32 0.0, %v470
        %v472 = vpop.f32.mrf.mxu0
        %v473 = vadd.f32 0.0, %v472
        %474 = vmatmul.bf16.gmra.mxu0 %v395
        %v475 = vpop.f32.mrf.mxu0
        %v476 = vadd.f32 0.0, %v475
        %v477 = vpop.f32.mrf.mxu0
        %v478 = vadd.f32 0.0, %v477
        %479 = vmatmul.bf16.gmra.mxu0 %v398
        %v480 = vpop.f32.mrf.mxu0
        %v481 = vadd.f32 0.0, %v480
        %v482 = vpop.f32.mrf.mxu0
        %v483 = vadd.f32 0.0, %v482
        %484 = vmatmul.bf16.gmra.mxu0 %v401
        %v485 = vpop.f32.mrf.mxu0
        %v486 = vadd.f32 0.0, %v485
        %v487 = vpop.f32.mrf.mxu0
        %v488 = vadd.f32 0.0, %v487
        %489 = vmatmul.bf16.gmra.mxu0 %v404
        %v490 = vpop.f32.mrf.mxu0
        %v491 = vadd.f32 0.0, %v490
        %v492 = vpop.f32.mrf.mxu0
        %v493 = vadd.f32 0.0, %v492
        %494 = vdwg.mxu0
        %v495 = vxor.u32 %v416, 2147483648
        %v496 = vxor.u32 %v418, 2147483648
        %v497 = vxor.u32 %v421, 2147483648
        %v498 = vxor.u32 %v423, 2147483648
        %v499 = vxor.u32 %v426, 2147483648
        %v500 = vxor.u32 %v428, 2147483648
        %v501 = vxor.u32 %v431, 2147483648
        %v502 = vxor.u32 %v433, 2147483648
        %v503 = vxor.u32 %v436, 2147483648
        %v504 = vxor.u32 %v438, 2147483648
        %v505 = vxor.u32 %v441, 2147483648
        %v506 = vxor.u32 %v443, 2147483648
        %v507 = vxor.u32 %v446, 2147483648
        %v508 = vxor.u32 %v448, 2147483648
        %v509 = vxor.u32 %v451, 2147483648
        %v510 = vxor.u32 %v453, 2147483648
        %v511 = vxor.u32 %v456, 2147483648
        %v512 = vxor.u32 %v458, 2147483648
        %v513 = vxor.u32 %v461, 2147483648
        %v514 = vxor.u32 %v463, 2147483648
        %v515 = vxor.u32 %v466, 2147483648
        %v516 = vxor.u32 %v468, 2147483648
        %v517 = vxor.u32 %v471, 2147483648
        %v518 = vxor.u32 %v473, 2147483648
        %v519 = vxor.u32 %v476, 2147483648
        %v520 = vxor.u32 %v478, 2147483648
        %v521 = vxor.u32 %v481, 2147483648
        %v522 = vxor.u32 %v483, 2147483648
        %v523 = vxor.u32 %v486, 2147483648
        %v524 = vxor.u32 %v488, 2147483648
        %v525 = vxor.u32 %v491, 2147483648
        %v526 = vxor.u32 %v493, 2147483648
        %v527 = vmul.f32 %v495, 1.442695
        %v528 = vpow.pop %v527
        %v529 = vmul.f32 %v496, 1.442695
        %v530 = vpow.pop %v529
        %v531 = vmul.f32 %v497, 1.442695
        %v532 = vpow.pop %v531
        %v533 = vmul.f32 %v498, 1.442695
        %v534 = vpow.pop %v533
        %v535 = vmul.f32 %v499, 1.442695
        %v536 = vpow.pop %v535
        %v537 = vmul.f32 %v500, 1.442695
        %v538 = vpow.pop %v537
        %v539 = vmul.f32 %v501, 1.442695
        %v540 = vpow.pop %v539
        %v541 = vmul.f32 %v502, 1.442695
        %v542 = vpow.pop %v541
        %v543 = vmul.f32 %v503, 1.442695
        %v544 = vpow.pop %v543
        %v545 = vmul.f32 %v504, 1.442695
        %v546 = vpow.pop %v545
        %v547 = vmul.f32 %v505, 1.442695
        %v548 = vpow.pop %v547
        %v549 = vmul.f32 %v506, 1.442695
        %v550 = vpow.pop %v549
        %v551 = vmul.f32 %v507, 1.442695
        %v552 = vpow.pop %v551
        %v553 = vmul.f32 %v508, 1.442695
        %v554 = vpow.pop %v553
        %v555 = vmul.f32 %v509, 1.442695
        %v556 = vpow.pop %v555
        %v557 = vmul.f32 %v510, 1.442695
        %v558 = vpow.pop %v557
        %v559 = vmul.f32 %v511, 1.442695
        %v560 = vpow.pop %v559
        %v561 = vmul.f32 %v512, 1.442695
        %v562 = vpow.pop %v561
        %v563 = vmul.f32 %v513, 1.442695
        %v564 = vpow.pop %v563
        %v565 = vmul.f32 %v514, 1.442695
        %v566 = vpow.pop %v565
        %v567 = vmul.f32 %v515, 1.442695
        %v568 = vpow.pop %v567
        %v569 = vmul.f32 %v516, 1.442695
        %v570 = vpow.pop %v569
        %v571 = vmul.f32 %v517, 1.442695
        %v572 = vpow.pop %v571
        %v573 = vmul.f32 %v518, 1.442695
        %v574 = vpow.pop %v573
        %v575 = vmul.f32 %v519, 1.442695
        %v576 = vpow.pop %v575
        %v577 = vmul.f32 %v520, 1.442695
        %v578 = vpow.pop %v577
        %v579 = vmul.f32 %v521, 1.442695
        %v580 = vpow.pop %v579
        %v581 = vmul.f32 %v522, 1.442695
        %v582 = vpow.pop %v581
        %v583 = vmul.f32 %v523, 1.442695
        %v584 = vpow.pop %v583
        %v585 = vmul.f32 %v524, 1.442695
        %v586 = vpow.pop %v585
        %v587 = vmul.f32 %v525, 1.442695
        %v588 = vpow.pop %v587
        %v589 = vmul.f32 %v526, 1.442695
        %v590 = vpow.pop %v589
        %v591 = vadd.f32 %v528, 1.0
        %v592 = vadd.f32 %v530, 1.0
        %v593 = vadd.f32 %v532, 1.0
        %v594 = vadd.f32 %v534, 1.0
        %v595 = vadd.f32 %v536, 1.0
        %v596 = vadd.f32 %v538, 1.0
        %v597 = vadd.f32 %v540, 1.0
        %v598 = vadd.f32 %v542, 1.0
        %v599 = vadd.f32 %v544, 1.0
        %v600 = vadd.f32 %v546, 1.0
        %v601 = vadd.f32 %v548, 1.0
        %v602 = vadd.f32 %v550, 1.0
        %v603 = vadd.f32 %v552, 1.0
        %v604 = vadd.f32 %v554, 1.0
        %v605 = vadd.f32 %v556, 1.0
        %v606 = vadd.f32 %v558, 1.0
        %v607 = vadd.f32 %v560, 1.0
        %v608 = vadd.f32 %v562, 1.0
        %v609 = vadd.f32 %v564, 1.0
        %v610 = vadd.f32 %v566, 1.0
        %v611 = vadd.f32 %v568, 1.0
        %v612 = vadd.f32 %v570, 1.0
        %v613 = vadd.f32 %v572, 1.0
        %v614 = vadd.f32 %v574, 1.0
        %v615 = vadd.f32 %v576, 1.0
        %v616 = vadd.f32 %v578, 1.0
        %v617 = vadd.f32 %v580, 1.0
        %v618 = vadd.f32 %v582, 1.0
        %v619 = vadd.f32 %v584, 1.0
        %v620 = vadd.f32 %v586, 1.0
        %v621 = vadd.f32 %v588, 1.0
        %v622 = vadd.f32 %v590, 1.0
        %v623 = vrcp.pop %v591
        %v624 = vmul.f32 %v591, %v623
        %v625 = vsub.f32 1.0, %v624
        %v626 = vmul.f32 %v623, %v625
        %v627 = vadd.f32 %v623, %v626
        %vm628 = vweird.f32 %v591
        %vm629 = vweird.f32 %v623
        %vm630 = vmor %vm628, %vm629
        %v631 = vsel %vm630, %v623, %v627
        %v632 = vand.u32 2147483647, %v591
        %vm633 = vcmp.eq.f32.partialorder %v632, 8.507059e+37
        %v634 = vand.u32 %v591, 2147483648
        %v635 = vor.u32 1.1754944e-38, %v634
        %v636 = vsel %vm633, %v635, %v631
        %v637 = vmul.f32 1.0, %v636
        %v638 = vrcp.pop %v592
        %v639 = vmul.f32 %v592, %v638
        %v640 = vsub.f32 1.0, %v639
        %v641 = vmul.f32 %v638, %v640
        %v642 = vadd.f32 %v638, %v641
        %vm643 = vweird.f32 %v592
        %vm644 = vweird.f32 %v638
        %vm645 = vmor %vm643, %vm644
        %v646 = vsel %vm645, %v638, %v642
        %v647 = vand.u32 2147483647, %v592
        %vm648 = vcmp.eq.f32.partialorder %v647, 8.507059e+37
        %v649 = vand.u32 %v592, 2147483648
        %v650 = vor.u32 1.1754944e-38, %v649
        %v651 = vsel %vm648, %v650, %v646
        %v652 = vmul.f32 1.0, %v651
        %v653 = vrcp.pop %v593
        %v654 = vmul.f32 %v593, %v653
        %v655 = vsub.f32 1.0, %v654
        %v656 = vmul.f32 %v653, %v655
        %v657 = vadd.f32 %v653, %v656
        %vm658 = vweird.f32 %v593
        %vm659 = vweird.f32 %v653
        %vm660 = vmor %vm658, %vm659
        %v661 = vsel %vm660, %v653, %v657
        %v662 = vand.u32 2147483647, %v593
        %vm663 = vcmp.eq.f32.partialorder %v662, 8.507059e+37
        %v664 = vand.u32 %v593, 2147483648
        %v665 = vor.u32 1.1754944e-38, %v664
        %v666 = vsel %vm663, %v665, %v661
        %v667 = vmul.f32 1.0, %v666
        %v668 = vrcp.pop %v594
        %v669 = vmul.f32 %v594, %v668
        %v670 = vsub.f32 1.0, %v669
        %v671 = vmul.f32 %v668, %v670
        %v672 = vadd.f32 %v668, %v671
        %vm673 = vweird.f32 %v594
        %vm674 = vweird.f32 %v668
        %vm675 = vmor %vm673, %vm674
        %v676 = vsel %vm675, %v668, %v672
        %v677 = vand.u32 2147483647, %v594
        %vm678 = vcmp.eq.f32.partialorder %v677, 8.507059e+37
        %v679 = vand.u32 %v594, 2147483648
        %v680 = vor.u32 1.1754944e-38, %v679
        %v681 = vsel %vm678, %v680, %v676
        %v682 = vmul.f32 1.0, %v681
        %v683 = vrcp.pop %v595
        %v684 = vmul.f32 %v595, %v683
        %v685 = vsub.f32 1.0, %v684
        %v686 = vmul.f32 %v683, %v685
        %v687 = vadd.f32 %v683, %v686
        %vm688 = vweird.f32 %v595
        %vm689 = vweird.f32 %v683
        %vm690 = vmor %vm688, %vm689
        %v691 = vsel %vm690, %v683, %v687
        %v692 = vand.u32 2147483647, %v595
        %vm693 = vcmp.eq.f32.partialorder %v692, 8.507059e+37
        %v694 = vand.u32 %v595, 2147483648
        %v695 = vor.u32 1.1754944e-38, %v694
        %v696 = vsel %vm693, %v695, %v691
        %v697 = vmul.f32 1.0, %v696
        %v698 = vrcp.pop %v596
        %v699 = vmul.f32 %v596, %v698
        %v700 = vsub.f32 1.0, %v699
        %v701 = vmul.f32 %v698, %v700
        %v702 = vadd.f32 %v698, %v701
        %vm703 = vweird.f32 %v596
        %vm704 = vweird.f32 %v698
        %vm705 = vmor %vm703, %vm704
        %v706 = vsel %vm705, %v698, %v702
        %v707 = vand.u32 2147483647, %v596
        %vm708 = vcmp.eq.f32.partialorder %v707, 8.507059e+37
        %v709 = vand.u32 %v596, 2147483648
        %v710 = vor.u32 1.1754944e-38, %v709
        %v711 = vsel %vm708, %v710, %v706
        %v712 = vmul.f32 1.0, %v711
        %v713 = vrcp.pop %v597
        %v714 = vmul.f32 %v597, %v713
        %v715 = vsub.f32 1.0, %v714
        %v716 = vmul.f32 %v713, %v715
        %v717 = vadd.f32 %v713, %v716
        %vm718 = vweird.f32 %v597
        %vm719 = vweird.f32 %v713
        %vm720 = vmor %vm718, %vm719
        %v721 = vsel %vm720, %v713, %v717
        %v722 = vand.u32 2147483647, %v597
        %vm723 = vcmp.eq.f32.partialorder %v722, 8.507059e+37
        %v724 = vand.u32 %v597, 2147483648
        %v725 = vor.u32 1.1754944e-38, %v724
        %v726 = vsel %vm723, %v725, %v721
        %v727 = vmul.f32 1.0, %v726
        %v728 = vrcp.pop %v598
        %v729 = vmul.f32 %v598, %v728
        %v730 = vsub.f32 1.0, %v729
        %v731 = vmul.f32 %v728, %v730
        %v732 = vadd.f32 %v728, %v731
        %vm733 = vweird.f32 %v598
        %vm734 = vweird.f32 %v728
        %vm735 = vmor %vm733, %vm734
        %v736 = vsel %vm735, %v728, %v732
        %v737 = vand.u32 2147483647, %v598
        %vm738 = vcmp.eq.f32.partialorder %v737, 8.507059e+37
        %v739 = vand.u32 %v598, 2147483648
        %v740 = vor.u32 1.1754944e-38, %v739
        %v741 = vsel %vm738, %v740, %v736
        %v742 = vmul.f32 1.0, %v741
        %v743 = vrcp.pop %v599
        %v744 = vmul.f32 %v599, %v743
        %v745 = vsub.f32 1.0, %v744
        %v746 = vmul.f32 %v743, %v745
        %v747 = vadd.f32 %v743, %v746
        %vm748 = vweird.f32 %v599
        %vm749 = vweird.f32 %v743
        %vm750 = vmor %vm748, %vm749
        %v751 = vsel %vm750, %v743, %v747
        %v752 = vand.u32 2147483647, %v599
        %vm753 = vcmp.eq.f32.partialorder %v752, 8.507059e+37
        %v754 = vand.u32 %v599, 2147483648
        %v755 = vor.u32 1.1754944e-38, %v754
        %v756 = vsel %vm753, %v755, %v751
        %v757 = vmul.f32 1.0, %v756
        %v758 = vrcp.pop %v600
        %v759 = vmul.f32 %v600, %v758
        %v760 = vsub.f32 1.0, %v759
        %v761 = vmul.f32 %v758, %v760
        %v762 = vadd.f32 %v758, %v761
        %vm763 = vweird.f32 %v600
        %vm764 = vweird.f32 %v758
        %vm765 = vmor %vm763, %vm764
        %v766 = vsel %vm765, %v758, %v762
        %v767 = vand.u32 2147483647, %v600
        %vm768 = vcmp.eq.f32.partialorder %v767, 8.507059e+37
        %v769 = vand.u32 %v600, 2147483648
        %v770 = vor.u32 1.1754944e-38, %v769
        %v771 = vsel %vm768, %v770, %v766
        %v772 = vmul.f32 1.0, %v771
        %v773 = vrcp.pop %v601
        %v774 = vmul.f32 %v601, %v773
        %v775 = vsub.f32 1.0, %v774
        %v776 = vmul.f32 %v773, %v775
        %v777 = vadd.f32 %v773, %v776
        %vm778 = vweird.f32 %v601
        %vm779 = vweird.f32 %v773
        %vm780 = vmor %vm778, %vm779
        %v781 = vsel %vm780, %v773, %v777
        %v782 = vand.u32 2147483647, %v601
        %vm783 = vcmp.eq.f32.partialorder %v782, 8.507059e+37
        %v784 = vand.u32 %v601, 2147483648
        %v785 = vor.u32 1.1754944e-38, %v784
        %v786 = vsel %vm783, %v785, %v781
        %v787 = vmul.f32 1.0, %v786
        %v788 = vrcp.pop %v602
        %v789 = vmul.f32 %v602, %v788
        %v790 = vsub.f32 1.0, %v789
        %v791 = vmul.f32 %v788, %v790
        %v792 = vadd.f32 %v788, %v791
        %vm793 = vweird.f32 %v602
        %vm794 = vweird.f32 %v788
        %vm795 = vmor %vm793, %vm794
        %v796 = vsel %vm795, %v788, %v792
        %v797 = vand.u32 2147483647, %v602
        %vm798 = vcmp.eq.f32.partialorder %v797, 8.507059e+37
        %v799 = vand.u32 %v602, 2147483648
        %v800 = vor.u32 1.1754944e-38, %v799
        %v801 = vsel %vm798, %v800, %v796
        %v802 = vmul.f32 1.0, %v801
        %v803 = vrcp.pop %v603
        %v804 = vmul.f32 %v603, %v803
        %v805 = vsub.f32 1.0, %v804
        %v806 = vmul.f32 %v803, %v805
        %v807 = vadd.f32 %v803, %v806
        %vm808 = vweird.f32 %v603
        %vm809 = vweird.f32 %v803
        %vm810 = vmor %vm808, %vm809
        %v811 = vsel %vm810, %v803, %v807
        %v812 = vand.u32 2147483647, %v603
        %vm813 = vcmp.eq.f32.partialorder %v812, 8.507059e+37
        %v814 = vand.u32 %v603, 2147483648
        %v815 = vor.u32 1.1754944e-38, %v814
        %v816 = vsel %vm813, %v815, %v811
        %v817 = vmul.f32 1.0, %v816
        %v818 = vrcp.pop %v604
        %v819 = vmul.f32 %v604, %v818
        %v820 = vsub.f32 1.0, %v819
        %v821 = vmul.f32 %v818, %v820
        %v822 = vadd.f32 %v818, %v821
        %vm823 = vweird.f32 %v604
        %vm824 = vweird.f32 %v818
        %vm825 = vmor %vm823, %vm824
        %v826 = vsel %vm825, %v818, %v822
        %v827 = vand.u32 2147483647, %v604
        %vm828 = vcmp.eq.f32.partialorder %v827, 8.507059e+37
        %v829 = vand.u32 %v604, 2147483648
        %v830 = vor.u32 1.1754944e-38, %v829
        %v831 = vsel %vm828, %v830, %v826
        %v832 = vmul.f32 1.0, %v831
        %v833 = vrcp.pop %v605
        %v834 = vmul.f32 %v605, %v833
        %v835 = vsub.f32 1.0, %v834
        %v836 = vmul.f32 %v833, %v835
        %v837 = vadd.f32 %v833, %v836
        %vm838 = vweird.f32 %v605
        %vm839 = vweird.f32 %v833
        %vm840 = vmor %vm838, %vm839
        %v841 = vsel %vm840, %v833, %v837
        %v842 = vand.u32 2147483647, %v605
        %vm843 = vcmp.eq.f32.partialorder %v842, 8.507059e+37
        %v844 = vand.u32 %v605, 2147483648
        %v845 = vor.u32 1.1754944e-38, %v844
        %v846 = vsel %vm843, %v845, %v841
        %v847 = vmul.f32 1.0, %v846
        %v848 = vrcp.pop %v606
        %v849 = vmul.f32 %v606, %v848
        %v850 = vsub.f32 1.0, %v849
        %v851 = vmul.f32 %v848, %v850
        %v852 = vadd.f32 %v848, %v851
        %vm853 = vweird.f32 %v606
        %vm854 = vweird.f32 %v848
        %vm855 = vmor %vm853, %vm854
        %v856 = vsel %vm855, %v848, %v852
        %v857 = vand.u32 2147483647, %v606
        %vm858 = vcmp.eq.f32.partialorder %v857, 8.507059e+37
        %v859 = vand.u32 %v606, 2147483648
        %v860 = vor.u32 1.1754944e-38, %v859
        %v861 = vsel %vm858, %v860, %v856
        %v862 = vmul.f32 1.0, %v861
        %v863 = vrcp.pop %v607
        %v864 = vmul.f32 %v607, %v863
        %v865 = vsub.f32 1.0, %v864
        %v866 = vmul.f32 %v863, %v865
        %v867 = vadd.f32 %v863, %v866
        %vm868 = vweird.f32 %v607
        %vm869 = vweird.f32 %v863
        %vm870 = vmor %vm868, %vm869
        %v871 = vsel %vm870, %v863, %v867
        %v872 = vand.u32 2147483647, %v607
        %vm873 = vcmp.eq.f32.partialorder %v872, 8.507059e+37
        %v874 = vand.u32 %v607, 2147483648
        %v875 = vor.u32 1.1754944e-38, %v874
        %v876 = vsel %vm873, %v875, %v871
        %v877 = vmul.f32 1.0, %v876
        %v878 = vrcp.pop %v608
        %v879 = vmul.f32 %v608, %v878
        %v880 = vsub.f32 1.0, %v879
        %v881 = vmul.f32 %v878, %v880
        %v882 = vadd.f32 %v878, %v881
        %vm883 = vweird.f32 %v608
        %vm884 = vweird.f32 %v878
        %vm885 = vmor %vm883, %vm884
        %v886 = vsel %vm885, %v878, %v882
        %v887 = vand.u32 2147483647, %v608
        %vm888 = vcmp.eq.f32.partialorder %v887, 8.507059e+37
        %v889 = vand.u32 %v608, 2147483648
        %v890 = vor.u32 1.1754944e-38, %v889
        %v891 = vsel %vm888, %v890, %v886
        %v892 = vmul.f32 1.0, %v891
        %v893 = vrcp.pop %v609
        %v894 = vmul.f32 %v609, %v893
        %v895 = vsub.f32 1.0, %v894
        %v896 = vmul.f32 %v893, %v895
        %v897 = vadd.f32 %v893, %v896
        %vm898 = vweird.f32 %v609
        %vm899 = vweird.f32 %v893
        %vm900 = vmor %vm898, %vm899
        %v901 = vsel %vm900, %v893, %v897
        %v902 = vand.u32 2147483647, %v609
        %vm903 = vcmp.eq.f32.partialorder %v902, 8.507059e+37
        %v904 = vand.u32 %v609, 2147483648
        %v905 = vor.u32 1.1754944e-38, %v904
        %v906 = vsel %vm903, %v905, %v901
        %v907 = vmul.f32 1.0, %v906
        %v908 = vrcp.pop %v610
        %v909 = vmul.f32 %v610, %v908
        %v910 = vsub.f32 1.0, %v909
        %v911 = vmul.f32 %v908, %v910
        %v912 = vadd.f32 %v908, %v911
        %vm913 = vweird.f32 %v610
        %vm914 = vweird.f32 %v908
        %vm915 = vmor %vm913, %vm914
        %v916 = vsel %vm915, %v908, %v912
        %v917 = vand.u32 2147483647, %v610
        %vm918 = vcmp.eq.f32.partialorder %v917, 8.507059e+37
        %v919 = vand.u32 %v610, 2147483648
        %v920 = vor.u32 1.1754944e-38, %v919
        %v921 = vsel %vm918, %v920, %v916
        %v922 = vmul.f32 1.0, %v921
        %v923 = vrcp.pop %v611
        %v924 = vmul.f32 %v611, %v923
        %v925 = vsub.f32 1.0, %v924
        %v926 = vmul.f32 %v923, %v925
        %v927 = vadd.f32 %v923, %v926
        %vm928 = vweird.f32 %v611
        %vm929 = vweird.f32 %v923
        %vm930 = vmor %vm928, %vm929
        %v931 = vsel %vm930, %v923, %v927
        %v932 = vand.u32 2147483647, %v611
        %vm933 = vcmp.eq.f32.partialorder %v932, 8.507059e+37
        %v934 = vand.u32 %v611, 2147483648
        %v935 = vor.u32 1.1754944e-38, %v934
        %v936 = vsel %vm933, %v935, %v931
        %v937 = vmul.f32 1.0, %v936
        %v938 = vrcp.pop %v612
        %v939 = vmul.f32 %v612, %v938
        %v940 = vsub.f32 1.0, %v939
        %v941 = vmul.f32 %v938, %v940
        %v942 = vadd.f32 %v938, %v941
        %vm943 = vweird.f32 %v612
        %vm944 = vweird.f32 %v938
        %vm945 = vmor %vm943, %vm944
        %v946 = vsel %vm945, %v938, %v942
        %v947 = vand.u32 2147483647, %v612
        %vm948 = vcmp.eq.f32.partialorder %v947, 8.507059e+37
        %v949 = vand.u32 %v612, 2147483648
        %v950 = vor.u32 1.1754944e-38, %v949
        %v951 = vsel %vm948, %v950, %v946
        %v952 = vmul.f32 1.0, %v951
        %v953 = vrcp.pop %v613
        %v954 = vmul.f32 %v613, %v953
        %v955 = vsub.f32 1.0, %v954
        %v956 = vmul.f32 %v953, %v955
        %v957 = vadd.f32 %v953, %v956
        %vm958 = vweird.f32 %v613
        %vm959 = vweird.f32 %v953
        %vm960 = vmor %vm958, %vm959
        %v961 = vsel %vm960, %v953, %v957
        %v962 = vand.u32 2147483647, %v613
        %vm963 = vcmp.eq.f32.partialorder %v962, 8.507059e+37
        %v964 = vand.u32 %v613, 2147483648
        %v965 = vor.u32 1.1754944e-38, %v964
        %v966 = vsel %vm963, %v965, %v961
        %v967 = vmul.f32 1.0, %v966
        %v968 = vrcp.pop %v614
        %v969 = vmul.f32 %v614, %v968
        %v970 = vsub.f32 1.0, %v969
        %v971 = vmul.f32 %v968, %v970
        %v972 = vadd.f32 %v968, %v971
        %vm973 = vweird.f32 %v614
        %vm974 = vweird.f32 %v968
        %vm975 = vmor %vm973, %vm974
        %v976 = vsel %vm975, %v968, %v972
        %v977 = vand.u32 2147483647, %v614
        %vm978 = vcmp.eq.f32.partialorder %v977, 8.507059e+37
        %v979 = vand.u32 %v614, 2147483648
        %v980 = vor.u32 1.1754944e-38, %v979
        %v981 = vsel %vm978, %v980, %v976
        %v982 = vmul.f32 1.0, %v981
        %v983 = vrcp.pop %v615
        %v984 = vmul.f32 %v615, %v983
        %v985 = vsub.f32 1.0, %v984
        %v986 = vmul.f32 %v983, %v985
        %v987 = vadd.f32 %v983, %v986
        %vm988 = vweird.f32 %v615
        %vm989 = vweird.f32 %v983
        %vm990 = vmor %vm988, %vm989
        %v991 = vsel %vm990, %v983, %v987
        %v992 = vand.u32 2147483647, %v615
        %vm993 = vcmp.eq.f32.partialorder %v992, 8.507059e+37
        %v994 = vand.u32 %v615, 2147483648
        %v995 = vor.u32 1.1754944e-38, %v994
        %v996 = vsel %vm993, %v995, %v991
        %v997 = vmul.f32 1.0, %v996
        %v998 = vrcp.pop %v616
        %v999 = vmul.f32 %v616, %v998
        %v1000 = vsub.f32 1.0, %v999
        %v1001 = vmul.f32 %v998, %v1000
        %v1002 = vadd.f32 %v998, %v1001
        %vm1003 = vweird.f32 %v616
        %vm1004 = vweird.f32 %v998
        %vm1005 = vmor %vm1003, %vm1004
        %v1006 = vsel %vm1005, %v998, %v1002
        %v1007 = vand.u32 2147483647, %v616
        %vm1008 = vcmp.eq.f32.partialorder %v1007, 8.507059e+37
        %v1009 = vand.u32 %v616, 2147483648
        %v1010 = vor.u32 1.1754944e-38, %v1009
        %v1011 = vsel %vm1008, %v1010, %v1006
        %v1012 = vmul.f32 1.0, %v1011
        %v1013 = vrcp.pop %v617
        %v1014 = vmul.f32 %v617, %v1013
        %v1015 = vsub.f32 1.0, %v1014
        %v1016 = vmul.f32 %v1013, %v1015
        %v1017 = vadd.f32 %v1013, %v1016
        %vm1018 = vweird.f32 %v617
        %vm1019 = vweird.f32 %v1013
        %vm1020 = vmor %vm1018, %vm1019
        %v1021 = vsel %vm1020, %v1013, %v1017
        %v1022 = vand.u32 2147483647, %v617
        %vm1023 = vcmp.eq.f32.partialorder %v1022, 8.507059e+37
        %v1024 = vand.u32 %v617, 2147483648
        %v1025 = vor.u32 1.1754944e-38, %v1024
        %v1026 = vsel %vm1023, %v1025, %v1021
        %v1027 = vmul.f32 1.0, %v1026
        %v1028 = vrcp.pop %v618
        %v1029 = vmul.f32 %v618, %v1028
        %v1030 = vsub.f32 1.0, %v1029
        %v1031 = vmul.f32 %v1028, %v1030
        %v1032 = vadd.f32 %v1028, %v1031
        %vm1033 = vweird.f32 %v618
        %vm1034 = vweird.f32 %v1028
        %vm1035 = vmor %vm1033, %vm1034
        %v1036 = vsel %vm1035, %v1028, %v1032
        %v1037 = vand.u32 2147483647, %v618
        %vm1038 = vcmp.eq.f32.partialorder %v1037, 8.507059e+37
        %v1039 = vand.u32 %v618, 2147483648
        %v1040 = vor.u32 1.1754944e-38, %v1039
        %v1041 = vsel %vm1038, %v1040, %v1036
        %v1042 = vmul.f32 1.0, %v1041
        %v1043 = vrcp.pop %v619
        %v1044 = vmul.f32 %v619, %v1043
        %v1045 = vsub.f32 1.0, %v1044
        %v1046 = vmul.f32 %v1043, %v1045
        %v1047 = vadd.f32 %v1043, %v1046
        %vm1048 = vweird.f32 %v619
        %vm1049 = vweird.f32 %v1043
        %vm1050 = vmor %vm1048, %vm1049
        %v1051 = vsel %vm1050, %v1043, %v1047
        %v1052 = vand.u32 2147483647, %v619
        %vm1053 = vcmp.eq.f32.partialorder %v1052, 8.507059e+37
        %v1054 = vand.u32 %v619, 2147483648
        %v1055 = vor.u32 1.1754944e-38, %v1054
        %v1056 = vsel %vm1053, %v1055, %v1051
        %v1057 = vmul.f32 1.0, %v1056
        %v1058 = vrcp.pop %v620
        %v1059 = vmul.f32 %v620, %v1058
        %v1060 = vsub.f32 1.0, %v1059
        %v1061 = vmul.f32 %v1058, %v1060
        %v1062 = vadd.f32 %v1058, %v1061
        %vm1063 = vweird.f32 %v620
        %vm1064 = vweird.f32 %v1058
        %vm1065 = vmor %vm1063, %vm1064
        %v1066 = vsel %vm1065, %v1058, %v1062
        %v1067 = vand.u32 2147483647, %v620
        %vm1068 = vcmp.eq.f32.partialorder %v1067, 8.507059e+37
        %v1069 = vand.u32 %v620, 2147483648
        %v1070 = vor.u32 1.1754944e-38, %v1069
        %v1071 = vsel %vm1068, %v1070, %v1066
        %v1072 = vmul.f32 1.0, %v1071
        %v1073 = vrcp.pop %v621
        %v1074 = vmul.f32 %v621, %v1073
        %v1075 = vsub.f32 1.0, %v1074
        %v1076 = vmul.f32 %v1073, %v1075
        %v1077 = vadd.f32 %v1073, %v1076
        %vm1078 = vweird.f32 %v621
        %vm1079 = vweird.f32 %v1073
        %vm1080 = vmor %vm1078, %vm1079
        %v1081 = vsel %vm1080, %v1073, %v1077
        %v1082 = vand.u32 2147483647, %v621
        %vm1083 = vcmp.eq.f32.partialorder %v1082, 8.507059e+37
        %v1084 = vand.u32 %v621, 2147483648
        %v1085 = vor.u32 1.1754944e-38, %v1084
        %v1086 = vsel %vm1083, %v1085, %v1081
        %v1087 = vmul.f32 1.0, %v1086
        %v1088 = vrcp.pop %v622
        %v1089 = vmul.f32 %v622, %v1088
        %v1090 = vsub.f32 1.0, %v1089
        %v1091 = vmul.f32 %v1088, %v1090
        %v1092 = vadd.f32 %v1088, %v1091
        %vm1093 = vweird.f32 %v622
        %vm1094 = vweird.f32 %v1088
        %vm1095 = vmor %vm1093, %vm1094
        %v1096 = vsel %vm1095, %v1088, %v1092
        %v1097 = vand.u32 2147483647, %v622
        %vm1098 = vcmp.eq.f32.partialorder %v1097, 8.507059e+37
        %v1099 = vand.u32 %v622, 2147483648
        %v1100 = vor.u32 1.1754944e-38, %v1099
        %v1101 = vsel %vm1098, %v1100, %v1096
        %v1102 = vmul.f32 1.0, %v1101
        %v1103 = vmul.f32 %v416, %v637
        %v1104 = vmul.f32 %v418, %v652
        %v1105 = vmul.f32 %v421, %v667
        %v1106 = vmul.f32 %v423, %v682
        %v1107 = vmul.f32 %v426, %v697
        %v1108 = vmul.f32 %v428, %v712
        %v1109 = vmul.f32 %v431, %v727
        %v1110 = vmul.f32 %v433, %v742
        %v1111 = vmul.f32 %v436, %v757
        %v1112 = vmul.f32 %v438, %v772
        %v1113 = vmul.f32 %v441, %v787
        %v1114 = vmul.f32 %v443, %v802
        %v1115 = vmul.f32 %v446, %v817
        %v1116 = vmul.f32 %v448, %v832
        %v1117 = vmul.f32 %v451, %v847
        %v1118 = vmul.f32 %v453, %v862
        %v1119 = vmul.f32 %v456, %v877
        %v1120 = vmul.f32 %v458, %v892
        %v1121 = vmul.f32 %v461, %v907
        %v1122 = vmul.f32 %v463, %v922
        %v1123 = vmul.f32 %v466, %v937
        %v1124 = vmul.f32 %v468, %v952
        %v1125 = vmul.f32 %v471, %v967
        %v1126 = vmul.f32 %v473, %v982
        %v1127 = vmul.f32 %v476, %v997
        %v1128 = vmul.f32 %v478, %v1012
        %v1129 = vmul.f32 %v481, %v1027
        %v1130 = vmul.f32 %v483, %v1042
        %v1131 = vmul.f32 %v486, %v1057
        %v1132 = vmul.f32 %v488, %v1072
        %v1133 = vmul.f32 %v491, %v1087
        %v1134 = vmul.f32 %v493, %v1102
        %v1135 = vld [vmem:[#allocation2] sm:$0xff]
        %1136 = vmatpush.msra.mxu0 %v1118
        %1137 = vmatpush.msra.mxu0 %v1117
        %1138 = vmatpush.msra.mxu0 %v1116
        %1139 = vmatpush.msra.mxu0 %v1115
        %1140 = vmatpush.msra.mxu0 %v1114
        %1141 = vmatpush.msra.mxu0 %v1113
        %1142 = vmatpush.msra.mxu0 %v1112
        %1143 = vmatpush.msra.mxu0 %v1111
        %1144 = vmatpush.msra.mxu0 %v1110
        %1145 = vmatpush.msra.mxu0 %v1109
        %1146 = vmatpush.msra.mxu0 %v1108
        %1147 = vmatpush.msra.mxu0 %v1107
        %1148 = vmatpush.msra.mxu0 %v1106
        %1149 = vmatpush.msra.mxu0 %v1105
        %1150 = vmatpush.msra.mxu0 %v1104
        %1151 = vmatpush.msra.mxu0 %v1103
        %1152 = vmatmul.f32.gmra.mxu0 1.0
        %v1153 = vpop.f32.mrf.mxu0
        %v1154 = vadd.f32 0.0, %v1153
        %1155 = vdwg.mxu0
        %1156 = vmatpush.msra.mxu0 %v1134
        %1157 = vmatpush.msra.mxu0 %v1133
        %1158 = vmatpush.msra.mxu0 %v1132
        %1159 = vmatpush.msra.mxu0 %v1131
        %1160 = vmatpush.msra.mxu0 %v1130
        %1161 = vmatpush.msra.mxu0 %v1129
        %1162 = vmatpush.msra.mxu0 %v1128
        %1163 = vmatpush.msra.mxu0 %v1127
        %1164 = vmatpush.msra.mxu0 %v1126
        %1165 = vmatpush.msra.mxu0 %v1125
        %1166 = vmatpush.msra.mxu0 %v1124
        %1167 = vmatpush.msra.mxu0 %v1123
        %1168 = vmatpush.msra.mxu0 %v1122
        %1169 = vmatpush.msra.mxu0 %v1121
        %1170 = vmatpush.msra.mxu0 %v1120
        %1171 = vmatpush.msra.mxu0 %v1119
        %1172 = vmatmul.f32.gmra.mxu0 1.0
        %v1173 = vpop.f32.mrf.mxu0
        %v1174 = vadd.f32 %v1154, %v1173
        %1175 = vdwg.mxu0
        %v1176 = vadd.f32 %v1135, %v1174
        %1177 = vst [vmem:[#allocation2] sm:$0xff] %v1176
        // Predicated region
        $region41: #{effnet_meta_forward.1} parent=35 // pred_check
          %p1178 = pneg %p224
        $region42: #{effnet_meta_forward.1} parent=35 // pred_check_branch
          %1180 = sbr.rel (%p1178) target = $region44
        $region43: #{effnet_meta_forward.1} parent=35 // pred_region
          %v1181 = vld [vmem:[#allocation2] sm:$0x1]
          %v1182 = vmul.f32 %v1181, 0.00390625
          %v1183 = vld [vmem:[%s2] sm:$0xf]
          %v1184 = vld [vmem:[%s2 + $0x4] sm:$0xf]
          %v1185 = vld [vmem:[%s2 + $0x8] sm:$0xf]
          %v1186 = vld [vmem:[%s2 + $0xc] sm:$0xf]
          %v1187 = vld [vmem:[%s2 + $0x10] sm:$0xf]
          %v1188 = vld [vmem:[%s2 + $0x14] sm:$0xf]
          %v1189 = vld [vmem:[%s2 + $0x18] sm:$0xf]
          %v1190 = vld [vmem:[%s2 + $0x1c] sm:$0xf]
          %v1191 = vld [vmem:[%s2 + $0x20] sm:$0xf]
          %v1192 = vld [vmem:[%s2 + $0x24] sm:$0xf]
          %v1193 = vld [vmem:[%s2 + $0x28] sm:$0xf]
          %v1194 = vld [vmem:[%s2 + $0x2c] sm:$0xf]
          %v1195 = vld [vmem:[%s2 + $0x30] sm:$0xf]
          %v1196 = vld [vmem:[%s2 + $0x34] sm:$0xf]
          %v1197 = vld [vmem:[%s2 + $0x38] sm:$0xf]
          %v1198 = vld [vmem:[%s2 + $0x3c] sm:$0xf]
          %v1199 = vunpack.c.l.bf16 %v1183
          %v1200 = vunpack.c.l.bf16 %v1184
          %v1201 = vunpack.c.l.bf16 %v1185
          %v1202 = vunpack.c.l.bf16 %v1186
          %v1203 = vunpack.c.l.bf16 %v1187
          %v1204 = vunpack.c.l.bf16 %v1188
          %v1205 = vunpack.c.l.bf16 %v1189
          %v1206 = vunpack.c.l.bf16 %v1190
          %v1207 = vunpack.c.l.bf16 %v1191
          %v1208 = vunpack.c.l.bf16 %v1192
          %v1209 = vunpack.c.l.bf16 %v1193
          %v1210 = vunpack.c.l.bf16 %v1194
          %v1211 = vunpack.c.l.bf16 %v1195
          %v1212 = vunpack.c.l.bf16 %v1196
          %v1213 = vunpack.c.l.bf16 %v1197
          %v1214 = vunpack.c.l.bf16 %v1198
          %v1215 = vld [vmem:[%s3] sm:$0x1]
          %1216 = vmatpush.msra.mxu0 %v1214
          %1217 = vmatpush.msra.mxu0 %v1213
          %1218 = vmatpush.msra.mxu0 %v1212
          %1219 = vmatpush.msra.mxu0 %v1211
          %1220 = vmatpush.msra.mxu0 %v1210
          %1221 = vmatpush.msra.mxu0 %v1209
          %1222 = vmatpush.msra.mxu0 %v1208
          %1223 = vmatpush.msra.mxu0 %v1207
          %1224 = vmatpush.msra.mxu0 %v1206
          %1225 = vmatpush.msra.mxu0 %v1205
          %1226 = vmatpush.msra.mxu0 %v1204
          %1227 = vmatpush.msra.mxu0 %v1203
          %1228 = vmatpush.msra.mxu0 %v1202
          %1229 = vmatpush.msra.mxu0 %v1201
          %1230 = vmatpush.msra.mxu0 %v1200
          %1231 = vmatpush.msra.mxu0 %v1199
          %1232 = vmatmul.f32.gmra.mxu0 %v1182
          %v1233 = vpop.f32.mrf.mxu0
          %v1234 = vadd.f32 %v1215, %v1233
          %1235 = vdwg.mxu0
          %1236 = vst [vmem:[%s212] sm:$0x1] %v1234
        $region44: #{effnet_meta_forward.1} parent=35 // pred_fallthru
          _
        %s1237 = sand.u32 %s129, 1
        %s1238 = scalar_lea.sflag [#allocation4], %s1237
        %s1239 = sand.u32 %s129, 1
        %s1240 = scalar_lea.vmem [#allocation3], %s1239
        // Predicated region
        $region45: #{effnet_meta_forward.1} parent=35 // pred_check
          %p1241 = pneg %p139
        $region46: #{effnet_meta_forward.1} parent=35 // pred_check_branch
          %1243 = sbr.rel (%p1241) target = $region48
        $region47: #{effnet_meta_forward.1} parent=35 // pred_region
          %1245 = vsyncadd %s1238, 0
          %s1246 = scalar_lea.hbm %s4, %s22
          %s1248 = sshll.u32 %s1240, 4
          %s1249 = int_to_ptr.vmem [resolvable:$true] %s1248
          %s1250 = sshll.u32 %s1246, 4
          %s1251 = int_to_ptr.hbm [resolvable:$true] %s1250
          %1253 = dma.vmem_to_hbm [thread:$0]  %s1249, 16, %s1251, %s1238
        $region48: #{effnet_meta_forward.1} parent=35 // pred_fallthru
          _
      $region36: #{effnet_meta_forward.1} parent=5 // pred_fallthru
        _
      %p1254 = scmp.le.s32.totalorder 2, %s13
      // Predicated region
      $region49: #{effnet_meta_forward.1} parent=5 // pred_check
        %p1255 = pneg %p1254
      $region50: #{effnet_meta_forward.1} parent=5 // pred_check_branch
        %1257 = sbr.rel (%p1255) target = $region52
      $region51: #{effnet_meta_forward.1} parent=5 // pred_region
        %s1258 = ssub.s32 %s13, 2
        // Predicated region
        $region53: #{effnet_meta_forward.1} parent=51 // pred_check
          %p1259 = pneg %p145
        $region54: #{effnet_meta_forward.1} parent=51 // pred_check_branch
          %1261 = sbr.rel (%p1259) target = $region56
        $region55: #{effnet_meta_forward.1} parent=51 // pred_region
          %s1262 = sand.u32 %s130, 1
          %s1263 = scalar_lea.sflag [#allocation4], %s1262
          %s1264 = sand.u32 %s130, 1
          %s1265 = scalar_lea.vmem [#allocation3], %s1264
          %1267 = dma.done %s1263, 16
        $region56: #{effnet_meta_forward.1} parent=51 // pred_fallthru
          _
      $region52: #{effnet_meta_forward.1} parent=5 // pred_fallthru
        _
    $region6: #{effnet_meta_forward.1} parent=1 // loop_footer
      %s17 = sadd.s32 1, %s13
    $region7: #{effnet_meta_forward.1} parent=1 // loop_footer_branch
      %12 = sbr.rel target = $region3
    $region8: #{effnet_meta_forward.1} parent=1 // loop_exit
      _
    %1268 = vsyncpa [#allocation4], 1
    %s1269 = scalar_lea.sflag [#allocation4], 1
    %1270 = vsyncpa %s1269, 1

</llo_original>
